<compile_context>
chip_gen: v7x
topology: tpu7x:2x2x1
jax: 0.10.0
libtpu: 0.0.40
codegen_flags: <defaults>
</compile_context>

<pallas_src>
import functools

import jax
import jax.numpy as jnp
from jax.experimental import pallas as pl
from jax.experimental.pallas import tpu as pltpu


def _round_up(x, m):
    return ((x + m - 1) // m) * m


def _recip(x):
    """EUP approximate reciprocal + one Newton step (≈ exact fp32, no divide)."""
    r = pl.reciprocal(x, approx=True)
    return r * (2.0 - x * r)


def _vmem_capacity_bytes():
    try:
        return int(pltpu.get_tpu_info().vmem_capacity_bytes)
    except Exception:
        return 64 << 20  # conservative default (v7x per-TC VMEM)


def gate_kernel(x_ref, w_ref, b_ref, idx_ref, comb_ref, loss_ref,
                *, n_experts, e_pad, topk, n_tokens, block_n):
    x = x_ref[...]                                      # [TN, d] native dtype
    w = w_ref[...]                                      # [d, E_pad] native dtype
    b = b_ref[...]                                      # [1, E_pad] fp32

    # ---- dispatch linear (MXU, native-dtype operands, fp32 accumulate) ----
    logits = jnp.dot(x, w, preferred_element_type=jnp.float32) + b   # [TN, E_pad]

    col = jax.lax.broadcasted_iota(jnp.int32, (block_n, e_pad), 1)   # [TN, E_pad]

    # Ragged last tile: rows >= n_tokens hold undefined data (Pallas partial
    # block).  Mask them out of the loss partials with jnp.where (NaN-safe).
    if n_tokens % block_n != 0:
        rows = (jax.lax.broadcasted_iota(jnp.int32, (block_n, 1), 0)
                + pl.program_id(0) * block_n)
        row_mask = rows < n_tokens                                   # bool [TN, 1]
    else:
        row_mask = None

    # ---- softmax over the real experts (padded columns -> probability 0) ----
    m = jnp.max(logits, axis=-1, keepdims=True)
    e = jnp.exp(logits - m)
    if n_experts < e_pad:
        e = jnp.where(col < n_experts, e, 0.0)
    scores = e * _recip(jnp.sum(e, axis=-1, keepdims=True))          # [TN, E_pad]

    # ---- top-k via iterative masked argmax (k small & static) ----
    work = scores
    vals, idxs = [], []
    for _ in range(topk):
        v = jnp.max(work, axis=-1, keepdims=True)                    # [TN, 1]
        pick = jnp.min(jnp.where(work == v, col, e_pad), axis=-1,
                       keepdims=True)                                # first occurrence
        vals.append(v)
        idxs.append(pick)
        work = jnp.where(col == pick, -jnp.inf, work)

    # ---- combine scores: single concatenated stores per tile ----
    denom = vals[0]
    for j in range(1, topk):
        denom = denom + vals[j]
    comb_ref[...] = jnp.concatenate(vals, axis=-1) * _recip(denom)   # [TN, topk]
    idx_ref[...] = jnp.concatenate(idxs, axis=-1).astype(jnp.int32)  # [TN, topk]

    # ---- per-tile loss partial sums (reduced in the wrapper) ----
    # f-count: reuse the top-1 pick from the top-k loop (argmax, first occurrence).
    top1_hit = col == idxs[0]                                        # bool [TN, E_pad]
    if row_mask is not None:
        is_arg = jnp.where(jnp.logical_and(top1_hit, row_mask), 1.0, 0.0)
        p_masked = jnp.where(row_mask, scores, 0.0)
    else:
        is_arg = top1_hit.astype(jnp.float32)
        p_masked = scores
    f_sum = jnp.sum(is_arg, axis=0, keepdims=True)                   # [1, E_pad]
    p_sum = jnp.sum(p_masked, axis=0, keepdims=True)                 # [1, E_pad]

    # z-router loss on the softmax probabilities (matches the torch reference).
    # scores ∈ [0, 1] so exp cannot overflow: skip the max-shift.
    esc = jnp.exp(scores)
    if n_experts < e_pad:
        esc = jnp.where(col < n_experts, esc, 0.0)
    lse = jnp.log(jnp.sum(esc, axis=-1, keepdims=True))              # [TN, 1]
    z = lse * lse
    if row_mask is not None:
        z = jnp.where(row_mask, z, 0.0)
    z_sum = jnp.sum(z, axis=0, keepdims=True)                        # [1, 1]

    loss_ref[...] = jnp.concatenate(
        [f_sum, p_sum, jnp.broadcast_to(z_sum, (1, e_pad))], axis=0)[None]


def gate_forward(x, w, b, *, n_experts, topk, alpha=0.01, beta=0.1,
                 block_n=None):
    """x: [B, T, d] (native dtype); w: [d, E]; b: [E].

    Returns (topk_indices [B,T,k] int32, combine [B,T,k] f32, bal_loss, z_loss).
    """
    B, T, d = x.shape
    N = B * T
    e_pad = _round_up(n_experts, 128)

    x2 = x.reshape(N, d)                       # no pad, no dtype cast in wrapper

    # ---- VMEM-aware tile sizing ----
    vmem_cap = _vmem_capacity_bytes()
    big_vmem = vmem_cap >= (96 << 20)          # v5e/v6e: 128 MiB; v7x: 64 MiB
    tile_target = (8 << 20) if big_vmem else (2 << 20)
    row_cap = 2048 if big_vmem else 1024
    vmem_limit = (64 << 20) if big_vmem else (36 << 20)

    bytes_per_row = d * jnp.dtype(x.dtype).itemsize
    if block_n is None:
        block_n = max(8, min(row_cap, tile_target // max(1, bytes_per_row)))
    block_n = max(8, (int(block_n) // 8) * 8)
    # Guarantee >= 2 tiles (keeps both v7x TensorCores busy on the parallel axis)
    # and never tile larger than the (rounded) token count.
    block_n = min(block_n,
                  max(8, _round_up(-(-N // 2), 8)),
                  _round_up(N, 8))
    num_tiles = -(-N // block_n)

    # Dispatch weight as [d, E_pad] in x's dtype (native MXU path); bias fp32.
    w_p = jnp.zeros((d, e_pad), x.dtype).at[:, :n_experts].set(w.astype(x.dtype))
    b_p = jnp.zeros((1, e_pad), jnp.float32).at[:, :n_experts].set(
        b.astype(jnp.float32).reshape(1, n_experts))

    kernel = functools.partial(
        gate_kernel, n_experts=n_experts, e_pad=e_pad, topk=topk,
        n_tokens=N, block_n=block_n)

    out_shape = (
        jax.ShapeDtypeStruct((N, topk), jnp.int32),              # top-k indices
        jax.ShapeDtypeStruct((N, topk), jnp.float32),            # combine scores
        jax.ShapeDtypeStruct((num_tiles, 3, e_pad), jnp.float32),  # loss partials
    )

    idx, comb, partials = pl.pallas_call(
        kernel,
        out_shape=out_shape,
        grid=(num_tiles,),
        in_specs=[
            pl.BlockSpec((block_n, d), lambda i: (i, 0)),     # x tile (pipelined)
            pl.BlockSpec((d, e_pad), lambda i: (0, 0)),       # weight stays resident
            pl.BlockSpec((1, e_pad), lambda i: (0, 0)),       # bias stays resident
        ],
        out_specs=(
            pl.BlockSpec((block_n, topk), lambda i: (i, 0)),
            pl.BlockSpec((block_n, topk), lambda i: (i, 0)),
            pl.BlockSpec((1, 3, e_pad), lambda i: (i, 0, 0)),
        ),
        compiler_params=pltpu.CompilerParams(
            dimension_semantics=("parallel",),
            vmem_limit_bytes=vmem_limit),
    )(x2, w_p, b_p)

    # ---- finalize losses from per-tile partials (tiny wrapper reduction) ----
    f = partials[:, 0, :n_experts].sum(axis=0) / N          # [E]
    P = partials[:, 1, :n_experts].sum(axis=0) / N          # [E]
    bal = alpha * jnp.mean(f * P)
    z = beta * (partials[:, 2, 0].sum() / N)

    return (idx.reshape(B, T, topk),
            comb.reshape(B, T, topk),
            bal, z)


if __name__ == "__main__":
    # Small shapes implied by the forward: x [B, T, d]
    B, T, d = 2, 9, 32
    n_experts, topk = 4, 2
    alpha, beta = 0.01, 0.1

    key = jax.random.PRNGKey(0)
    kx, kw, kb = jax.random.split(key, 3)
    x = jax.random.normal(kx, (B, T, d), dtype=jnp.float32)
    # nn.Linear(d, E) params; torch stores weight [E, d] -> we keep [d, E].
    bound = 1.0 / (d ** 0.5)
    w = jax.random.uniform(kw, (d, n_experts), jnp.float32, -bound, bound)
    b = jax.random.uniform(kb, (n_experts,), jnp.float32, -bound, bound)

    # block_n=8 -> 3 grid steps incl. a ragged tail tile (exercises masking).
    topk_idx, combine, bal_loss, z_loss = gate_forward(
        x, w, b, n_experts=n_experts, topk=topk, alpha=alpha, beta=beta,
        block_n=8)
    jax.block_until_ready((topk_idx, combine, bal_loss, z_loss))

    # ---- pure-JAX reference for correctness ----
    x2 = x.reshape(-1, d)
    logits = x2 @ w + b
    scores = jax.nn.softmax(logits, axis=-1)
    tv, ti = jax.lax.top_k(scores, topk)
    comb_ref = (tv / tv.sum(-1, keepdims=True)).reshape(B, T, topk)
    f_ref = jnp.mean((scores == scores.max(-1, keepdims=True)
                      ).astype(jnp.float32), axis=0)
    P_ref = scores.mean(axis=0)
    bal_ref = alpha * jnp.mean(f_ref * P_ref)
    z_ref = beta * jnp.mean(jax.nn.logsumexp(scores, axis=-1) ** 2)

    assert topk_idx.shape == (B, T, topk) and combine.shape == (B, T, topk)
    assert jnp.array_equal(topk_idx, ti.reshape(B, T, topk))
    assert jnp.allclose(combine, comb_ref, atol=1e-5, rtol=1e-5)
    assert jnp.allclose(combine.sum(-1), 1.0, atol=1e-5)
    assert jnp.allclose(bal_loss, bal_ref, rtol=1e-4, atol=1e-8)
    assert jnp.allclose(z_loss, z_ref, rtol=1e-4, atol=1e-7)

    print("KERNEL_OK")
</pallas_src>

<mosaic_0001>
module attributes {stable_mosaic.version = 11 : i64} {
  func.func @gate_kernel(%arg0: i32, %arg1: memref<8x32xf32, #tpu.memory_space<vmem>>, %arg2: memref<32x128xf32, #tpu.memory_space<vmem>>, %arg3: memref<1x128xf32, #tpu.memory_space<vmem>>, %arg4: memref<8x2xi32, #tpu.memory_space<vmem>>, %arg5: memref<8x2xf32, #tpu.memory_space<vmem>>, %arg6: memref<1x3x128xf32, #tpu.memory_space<vmem>>) attributes {dimension_semantics = [#tpu.dimension_semantics<parallel>], iteration_bounds = array<i64: 3>, scalar_prefetch = 0 : i64, scratch_operands = 0 : i64, tpu.core_type = #tpu.core_type<tc>, window_params = [{transform_indices = @transform_0, window_bounds = array<i64: 8, 32>}, {pipeline_mode = #tpu.pipeline_mode<synchronous>, transform_indices = @transform_1, window_bounds = array<i64: 32, 128>}, {pipeline_mode = #tpu.pipeline_mode<synchronous>, transform_indices = @transform_2, window_bounds = array<i64: 1, 128>}, {transform_indices = @transform_3, window_bounds = array<i64: 8, 2>}, {transform_indices = @transform_4, window_bounds = array<i64: 8, 2>}, {transform_indices = @transform_5, window_bounds = array<i64: 1, 3, 128>}]} {
    %c0 = arith.constant 0 : index
    %c0_0 = arith.constant 0 : index
    %0 = vector.load %arg1[%c0, %c0_0] : memref<8x32xf32, #tpu.memory_space<vmem>>, vector<8x32xf32>
    %c0_1 = arith.constant 0 : index
    %c0_2 = arith.constant 0 : index
    %1 = vector.load %arg2[%c0_1, %c0_2] : memref<32x128xf32, #tpu.memory_space<vmem>>, vector<32x128xf32>
    %c0_3 = arith.constant 0 : index
    %c0_4 = arith.constant 0 : index
    %2 = vector.load %arg3[%c0_3, %c0_4] : memref<1x128xf32, #tpu.memory_space<vmem>>, vector<1x128xf32>
    %cst = arith.constant dense<0.000000e+00> : vector<8x128xf32>
    %3 = tpu.matmul %0, %1, %cst {dimension_numbers = #tpu.dot_dimension_numbers<[1], [0], [0], [1], [0, 0, 1, 1], [], []>} : vector<8x32xf32>, vector<32x128xf32>, vector<8x128xf32> -> vector<8x128xf32>
    %4 = vector.broadcast %2 : vector<1x128xf32> to vector<8x128xf32>
    %5 = arith.addf %3, %4 : vector<8x128xf32>
    %6 = tpu.iota {dimensions = array<i32: 1>} : vector<8x128xi32>
    %7 = tpu.iota {dimensions = array<i32: 0>} : vector<8x1xi32>
    %c8_i32 = arith.constant 8 : i32
    %8 = arith.muli %arg0, %c8_i32 : i32
    %9 = vector.broadcast %8 : i32 to vector<8x1xi32>
    %10 = arith.addi %7, %9 : vector<8x1xi32>
    %c18_i32 = arith.constant 18 : i32
    %11 = vector.broadcast %c18_i32 : i32 to vector<8x1xi32>
    %12 = arith.cmpi slt, %10, %11 : vector<8x1xi32>
    %cst_5 = arith.constant dense<0xFF800000> : vector<8xf32>
    %13 = vector.multi_reduction <maximumf>, %5, %cst_5 [1] : vector<8x128xf32> to vector<8xf32>
    %14 = vector.shape_cast %13 : vector<8xf32> to vector<8x1xf32>
    %15 = vector.broadcast %14 : vector<8x1xf32> to vector<8x128xf32>
    %16 = arith.subf %5, %15 : vector<8x128xf32>
    %17 = math.exp %16 : vector<8x128xf32>
    %c4_i32 = arith.constant 4 : i32
    %18 = vector.broadcast %c4_i32 : i32 to vector<8x128xi32>
    %19 = arith.cmpi slt, %6, %18 : vector<8x128xi32>
    %cst_6 = arith.constant 0.000000e+00 : f32
    %20 = vector.broadcast %cst_6 : f32 to vector<8x128xf32>
    %21 = arith.select %19, %17, %20 : vector<8x128xi1>, vector<8x128xf32>
    %cst_7 = arith.constant dense<0.000000e+00> : vector<8xf32>
    %22 = vector.multi_reduction <add>, %21, %cst_7 [1] : vector<8x128xf32> to vector<8xf32>
    %23 = vector.shape_cast %22 : vector<8xf32> to vector<8x1xf32>
    %24 = tpu.reciprocal %23 {approx = true} : vector<8x1xf32> -> vector<8x1xf32>
    %25 = arith.mulf %23, %24 : vector<8x1xf32>
    %cst_8 = arith.constant 2.000000e+00 : f32
    %26 = vector.broadcast %cst_8 : f32 to vector<8x1xf32>
    %27 = arith.subf %26, %25 : vector<8x1xf32>
    %28 = arith.mulf %24, %27 : vector<8x1xf32>
    %29 = vector.broadcast %28 : vector<8x1xf32> to vector<8x128xf32>
    %30 = arith.mulf %21, %29 : vector<8x128xf32>
    %cst_9 = arith.constant dense<0xFF800000> : vector<8xf32>
    %31 = vector.multi_reduction <maximumf>, %30, %cst_9 [1] : vector<8x128xf32> to vector<8xf32>
    %32 = vector.shape_cast %31 : vector<8xf32> to vector<8x1xf32>
    %33 = vector.broadcast %32 : vector<8x1xf32> to vector<8x128xf32>
    %34 = arith.cmpf oeq, %30, %33 : vector<8x128xf32>
    %c128_i32 = arith.constant 128 : i32
    %35 = vector.broadcast %c128_i32 : i32 to vector<8x128xi32>
    %36 = arith.select %34, %6, %35 : vector<8x128xi1>, vector<8x128xi32>
    %cst_10 = arith.constant dense<2147483647> : vector<8xi32>
    %37 = vector.multi_reduction <minsi>, %36, %cst_10 [1] : vector<8x128xi32> to vector<8xi32>
    %38 = vector.shape_cast %37 : vector<8xi32> to vector<8x1xi32>
    %39 = vector.broadcast %38 : vector<8x1xi32> to vector<8x128xi32>
    %40 = arith.cmpi eq, %6, %39 : vector<8x128xi32>
    %cst_11 = arith.constant 0xFF800000 : f32
    %41 = vector.broadcast %cst_11 : f32 to vector<8x128xf32>
    %42 = arith.select %40, %41, %30 : vector<8x128xi1>, vector<8x128xf32>
    %cst_12 = arith.constant dense<0xFF800000> : vector<8xf32>
    %43 = vector.multi_reduction <maximumf>, %42, %cst_12 [1] : vector<8x128xf32> to vector<8xf32>
    %44 = vector.shape_cast %43 : vector<8xf32> to vector<8x1xf32>
    %45 = vector.broadcast %44 : vector<8x1xf32> to vector<8x128xf32>
    %46 = arith.cmpf oeq, %42, %45 : vector<8x128xf32>
    %c128_i32_13 = arith.constant 128 : i32
    %47 = vector.broadcast %c128_i32_13 : i32 to vector<8x128xi32>
    %48 = arith.select %46, %6, %47 : vector<8x128xi1>, vector<8x128xi32>
    %cst_14 = arith.constant dense<2147483647> : vector<8xi32>
    %49 = vector.multi_reduction <minsi>, %48, %cst_14 [1] : vector<8x128xi32> to vector<8xi32>
    %50 = vector.shape_cast %49 : vector<8xi32> to vector<8x1xi32>
    %51 = arith.addf %32, %44 : vector<8x1xf32>
    %52 = tpu.concatenate %32, %44 in 1 : vector<8x1xf32>, vector<8x1xf32> -> vector<8x2xf32>
    %53 = tpu.reciprocal %51 {approx = true} : vector<8x1xf32> -> vector<8x1xf32>
    %54 = arith.mulf %51, %53 : vector<8x1xf32>
    %cst_15 = arith.constant 2.000000e+00 : f32
    %55 = vector.broadcast %cst_15 : f32 to vector<8x1xf32>
    %56 = arith.subf %55, %54 : vector<8x1xf32>
    %57 = arith.mulf %53, %56 : vector<8x1xf32>
    %58 = vector.broadcast %57 : vector<8x1xf32> to vector<8x2xf32>
    %59 = arith.mulf %52, %58 : vector<8x2xf32>
    %c0_16 = arith.constant 0 : index
    %c0_17 = arith.constant 0 : index
    %60 = vector.load %arg5[%c0_16, %c0_17] : memref<8x2xf32, #tpu.memory_space<vmem>>, vector<8x2xf32>
    tpu.vector_store %arg5[%c0_16, %c0_17], %59 {strides = array<i32>} : memref<8x2xf32, #tpu.memory_space<vmem>>, vector<8x2xf32>,
    %61 = tpu.concatenate %38, %50 in 1 : vector<8x1xi32>, vector<8x1xi32> -> vector<8x2xi32>
    %c0_18 = arith.constant 0 : index
    %c0_19 = arith.constant 0 : index
    %62 = vector.load %arg4[%c0_18, %c0_19] : memref<8x2xi32, #tpu.memory_space<vmem>>, vector<8x2xi32>
    tpu.vector_store %arg4[%c0_18, %c0_19], %61 {strides = array<i32>} : memref<8x2xi32, #tpu.memory_space<vmem>>, vector<8x2xi32>,
    %63 = vector.broadcast %38 : vector<8x1xi32> to vector<8x128xi32>
    %64 = arith.cmpi eq, %6, %63 : vector<8x128xi32>
    %65 = vector.broadcast %12 : vector<8x1xi1> to vector<8x128xi1>
    %66 = arith.andi %64, %65 : vector<8x128xi1>
    %cst_20 = arith.constant 1.000000e+00 : f32
    %cst_21 = arith.constant 0.000000e+00 : f32
    %67 = vector.broadcast %cst_20 : f32 to vector<8x128xf32>
    %68 = vector.broadcast %cst_21 : f32 to vector<8x128xf32>
    %69 = arith.select %66, %67, %68 : vector<8x128xi1>, vector<8x128xf32>
    %cst_22 = arith.constant 0.000000e+00 : f32
    %70 = vector.shape_cast %12 : vector<8x1xi1> to vector<8x1xi1>
    %71 = vector.broadcast %70 : vector<8x1xi1> to vector<8x128xi1>
    %72 = vector.broadcast %cst_22 : f32 to vector<8x128xf32>
    %73 = arith.select %71, %30, %72 : vector<8x128xi1>, vector<8x128xf32>
    %cst_23 = arith.constant dense<0.000000e+00> : vector<128xf32>
    %74 = vector.multi_reduction <add>, %69, %cst_23 [0] : vector<8x128xf32> to vector<128xf32>
    %75 = vector.shape_cast %74 : vector<128xf32> to vector<1x128xf32>
    %cst_24 = arith.constant dense<0.000000e+00> : vector<128xf32>
    %76 = vector.multi_reduction <add>, %73, %cst_24 [0] : vector<8x128xf32> to vector<128xf32>
    %77 = vector.shape_cast %76 : vector<128xf32> to vector<1x128xf32>
    %78 = math.exp %30 : vector<8x128xf32>
    %c4_i32_25 = arith.constant 4 : i32
    %79 = vector.broadcast %c4_i32_25 : i32 to vector<8x128xi32>
    %80 = arith.cmpi slt, %6, %79 : vector<8x128xi32>
    %cst_26 = arith.constant 0.000000e+00 : f32
    %81 = vector.broadcast %cst_26 : f32 to vector<8x128xf32>
    %82 = arith.select %80, %78, %81 : vector<8x128xi1>, vector<8x128xf32>
    %cst_27 = arith.constant dense<0.000000e+00> : vector<8xf32>
    %83 = vector.multi_reduction <add>, %82, %cst_27 [1] : vector<8x128xf32> to vector<8xf32>
    %84 = vector.shape_cast %83 : vector<8xf32> to vector<8x1xf32>
    %85 = math.log %84 : vector<8x1xf32>
    %86 = arith.mulf %85, %85 : vector<8x1xf32>
    %cst_28 = arith.constant 0.000000e+00 : f32
    %87 = vector.broadcast %cst_28 : f32 to vector<8x1xf32>
    %88 = arith.select %12, %86, %87 : vector<8x1xi1>, vector<8x1xf32>
    %cst_29 = arith.constant dense<0.000000e+00> : vector<1xf32>
    %89 = vector.multi_reduction <add>, %88, %cst_29 [0] : vector<8x1xf32> to vector<1xf32>
    %90 = vector.shape_cast %89 : vector<1xf32> to vector<1x1xf32>
    %91 = vector.shape_cast %90 : vector<1x1xf32> to vector<1x1xf32>
    %92 = vector.broadcast %91 : vector<1x1xf32> to vector<1x128xf32>
    %93 = tpu.concatenate %75, %77, %92 in 0 : vector<1x128xf32>, vector<1x128xf32>, vector<1x128xf32> -> vector<3x128xf32>
    %94 = vector.shape_cast %93 : vector<3x128xf32> to vector<1x3x128xf32>
    %c0_30 = arith.constant 0 : index
    %c0_31 = arith.constant 0 : index
    %c0_32 = arith.constant 0 : index
    %95 = vector.load %arg6[%c0_30, %c0_31, %c0_32] : memref<1x3x128xf32, #tpu.memory_space<vmem>>, vector<1x3x128xf32>
    tpu.vector_store %arg6[%c0_30, %c0_31, %c0_32], %94 {strides = array<i32>} : memref<1x3x128xf32, #tpu.memory_space<vmem>>, vector<1x3x128xf32>,
    return
  }
  func.func @transform_0(%arg0: i32) -> (i32, i32) {
    %c0_i32 = arith.constant 0 : i32
    %c0_i32_0 = arith.constant 0 : i32
    return %arg0, %c0_i32 : i32, i32
  }
  func.func @transform_1(%arg0: i32) -> (i32, i32) {
    %c0_i32 = arith.constant 0 : i32
    %c0_i32_0 = arith.constant 0 : i32
    %c0_i32_1 = arith.constant 0 : i32
    return %c0_i32, %c0_i32_0 : i32, i32
  }
  func.func @transform_2(%arg0: i32) -> (i32, i32) {
    %c0_i32 = arith.constant 0 : i32
    %c0_i32_0 = arith.constant 0 : i32
    %c0_i32_1 = arith.constant 0 : i32
    return %c0_i32, %c0_i32_0 : i32, i32
  }
  func.func @transform_3(%arg0: i32) -> (i32, i32) {
    %c0_i32 = arith.constant 0 : i32
    %c0_i32_0 = arith.constant 0 : i32
    return %arg0, %c0_i32 : i32, i32
  }
  func.func @transform_4(%arg0: i32) -> (i32, i32) {
    %c0_i32 = arith.constant 0 : i32
    %c0_i32_0 = arith.constant 0 : i32
    return %arg0, %c0_i32 : i32, i32
  }
  func.func @transform_5(%arg0: i32) -> (i32, i32, i32) {
    %c0_i32 = arith.constant 0 : i32
    %c0_i32_0 = arith.constant 0 : i32
    %c0_i32_1 = arith.constant 0 : i32
    return %arg0, %c0_i32, %c0_i32_0 : i32, i32, i32
  }
}

</mosaic_0001>

<llo_original>
// kernel: tpu_custom_call.1
$region0: #{tpu_custom_call.1}
  #allocation0 [shape = 'u32[]', space=smem, size = 0x4, offset = 0x4, fixed_abs, tag = 'smem constant byte address 0x4 - core index']
  #allocation1 [shape = 'u32[144,128]{1,0:T(1,128)}', space=vmem, size = 0x12000, scoped, tag = 'internal scratch']
  %s0 = inlined_call_operand.hbm [shape: f32[18,32], index: 0, kind: input, shape index: {}]
  %s1 = inlined_call_operand.hbm [shape: f32[32,128], index: 1, kind: input, shape index: {}]
  %s2 = inlined_call_operand.vmem [shape: f32[1,128], index: 2, kind: input, shape index: {}]
  %s3 = inlined_call_operand.vmem [shape: s32[18,2], index: 3, kind: output, shape index: {0}]
  %s4 = inlined_call_operand.vmem [shape: f32[18,2], index: 4, kind: output, shape index: {1}]
  %s5 = inlined_call_operand.hbm [shape: f32[3,3,128], index: 5, kind: output, shape index: {2}]
  %6 = xla_tuple %s3, %s4, %s5
  %s7 = sld [smem:[#allocation0]]
  $region69: #{tpu_custom_call.1} parent=0
    _
  %s9 = ssub.s32 1, %s7
  %s10 = scalar_select 0, %s9, %s7
  $region1: #{tpu_custom_call.1} parent=0
    #allocation2 [shape = 'u8[8192]{0}', space=vmem, size = 0x2000, scoped, tag = 'input window, operand 0']
    #allocation3 [shape = 's32[2]{0}', space=sflag, size = 0x8, scoped, tag = 'scoped memory for tpu_custom_call.1']
    #allocation4 [shape = 's32[2]{0}', space=sflag, size = 0x8, scoped, tag = 'scoped memory for tpu_custom_call.1']
    #allocation5 [shape = 'u8[16384]{0}', space=vmem, size = 0x4000, scoped, tag = 'input window, operand 1, single buffered']
    #allocation6 [shape = 's32[1]{0}', space=sflag, size = 0x4, scoped, tag = 'scoped memory for tpu_custom_call.1']
    #allocation7 [shape = 'u8[4096]{0}', space=vmem, size = 0x1000, scoped, tag = 'output window, operand 2']
    %11 = vsyncpa [#allocation3], 0
    %s12 = scalar_lea.sflag [#allocation3], 1
    %13 = vsyncpa %s12, 0
    %14 = vsyncpa [#allocation6], 0
    %15 = vsyncpa [#allocation4], 0
    %s16 = scalar_lea.sflag [#allocation4], 1
    %17 = vsyncpa %s16, 0
    loop: start=0, step=1, limit=5
    $region2: #{tpu_custom_call.1} parent=1 // loop_pre_header
      _
    $region3: #{tpu_custom_call.1} parent=1 // loop_header
      %s19 = sphi 0, %s23
      %p20 = scmp.ge.s32.totalorder %s19, 5
      %s29 = sphi 0, %s31
      %s32 = sphi 0, %s29
      %s33 = sphi 0, %s32
      %s49 = sphi 0, %s33
      %s53 = sphi 0, %s53
      %s55 = sphi 0, %s53
      %s56 = sphi 0, %s55
      %s70 = sphi 0, %s56
      %s74 = sphi 0, %s74
      %s76 = sphi 0, %s74
      %s77 = sphi 0, %s76
      %s91 = sphi 0, %s77
      %s97 = sphi 0, %s99
      %s100 = sphi 0, %s97
      %s101 = sphi 0, %s100
      %s117 = sphi 0, %s101
      %s123 = sphi 0, %s125
      %s126 = sphi 0, %s123
      %s127 = sphi 0, %s126
      %s143 = sphi 0, %s127
      %s149 = sphi 0, %s151
      %s152 = sphi 0, %s149
      %s153 = sphi 0, %s152
      %s169 = sphi 0, %s153
    $region4: #{tpu_custom_call.1} parent=1 // loop_header_branch
      %22 = sbr.rel (%p20) target = $region8
    $region5: #{tpu_custom_call.1} parent=1 // loop_body
      %s24 = ssub.s32 %s19, 1
      %s25 = ssub.s32 %s19, 2
      %s26 = sadd.s32 %s19, 1
      %s27 = ssub.s32 %s19, %s26
      %p28 = scmp.eq.s32.totalorder %s27, 0
      %s30 = sadd.s32 %s29, 1
      %s31 = scalar_select %p28, %s29, %s30
      %p34 = pneg %p28
      %p35 = scmp.eq.s32.totalorder %s19, 2
      %p36 = por %p34, %p35
      %p37 = scmp.ne.s32.totalorder %s29, %s32
      %p38 = scmp.eq.s32.totalorder %s19, 0
      %p39 = por %p37, %p38
      %p40 = scmp.ne.s32.totalorder %s29, %s32
      %p41 = scmp.eq.s32.totalorder %s24, 2
      %p42 = por %p40, %p41
      %p43 = scmp.ne.s32.totalorder %s32, %s33
      %p44 = scmp.eq.s32.totalorder %s24, 0
      %p45 = por %p43, %p44
      %p46 = scmp.ne.s32.totalorder %s32, %s33
      %p47 = scmp.eq.s32.totalorder %s25, 2
      %p48 = por %p46, %p47
      %p50 = scmp.ne.s32.totalorder %s33, %s49
      %p51 = scmp.eq.s32.totalorder %s25, 0
      %p52 = por %p50, %p51
      %s54 = sadd.s32 %s53, 1
      %p57 = scmp.eq.s32.totalorder %s19, 2
      %p58 = scmp.ne.s32.totalorder %s53, %s55
      %p59 = scmp.eq.s32.totalorder %s19, 0
      %p60 = por %p58, %p59
      %p61 = scmp.ne.s32.totalorder %s53, %s55
      %p62 = scmp.eq.s32.totalorder %s24, 2
      %p63 = por %p61, %p62
      %p64 = scmp.ne.s32.totalorder %s55, %s56
      %p65 = scmp.eq.s32.totalorder %s24, 0
      %p66 = por %p64, %p65
      %p67 = scmp.ne.s32.totalorder %s55, %s56
      %p68 = scmp.eq.s32.totalorder %s25, 2
      %p69 = por %p67, %p68
      %p71 = scmp.ne.s32.totalorder %s56, %s70
      %p72 = scmp.eq.s32.totalorder %s25, 0
      %p73 = por %p71, %p72
      %s75 = sadd.s32 %s74, 1
      %p78 = scmp.eq.s32.totalorder %s19, 2
      %p79 = scmp.ne.s32.totalorder %s74, %s76
      %p80 = scmp.eq.s32.totalorder %s19, 0
      %p81 = por %p79, %p80
      %p82 = scmp.ne.s32.totalorder %s74, %s76
      %p83 = scmp.eq.s32.totalorder %s24, 2
      %p84 = por %p82, %p83
      %p85 = scmp.ne.s32.totalorder %s76, %s77
      %p86 = scmp.eq.s32.totalorder %s24, 0
      %p87 = por %p85, %p86
      %p88 = scmp.ne.s32.totalorder %s76, %s77
      %p89 = scmp.eq.s32.totalorder %s25, 2
      %p90 = por %p88, %p89
      %p92 = scmp.ne.s32.totalorder %s77, %s91
      %p93 = scmp.eq.s32.totalorder %s25, 0
      %p94 = por %p92, %p93
      %s95 = ssub.s32 %s19, %s26
      %p96 = scmp.eq.s32.totalorder %s95, 0
      %s98 = sadd.s32 %s97, 1
      %s99 = scalar_select %p96, %s97, %s98
      %p102 = pneg %p96
      %p103 = scmp.eq.s32.totalorder %s19, 2
      %p104 = por %p102, %p103
      %p105 = scmp.ne.s32.totalorder %s97, %s100
      %p106 = scmp.eq.s32.totalorder %s19, 0
      %p107 = por %p105, %p106
      %p108 = scmp.ne.s32.totalorder %s97, %s100
      %p109 = scmp.eq.s32.totalorder %s24, 2
      %p110 = por %p108, %p109
      %p111 = scmp.ne.s32.totalorder %s100, %s101
      %p112 = scmp.eq.s32.totalorder %s24, 0
      %p113 = por %p111, %p112
      %p114 = scmp.ne.s32.totalorder %s100, %s101
      %p115 = scmp.eq.s32.totalorder %s25, 2
      %p116 = por %p114, %p115
      %p118 = scmp.ne.s32.totalorder %s101, %s117
      %p119 = scmp.eq.s32.totalorder %s25, 0
      %p120 = por %p118, %p119
      %s121 = ssub.s32 %s19, %s26
      %p122 = scmp.eq.s32.totalorder %s121, 0
      %s124 = sadd.s32 %s123, 1
      %s125 = scalar_select %p122, %s123, %s124
      %p128 = pneg %p122
      %p129 = scmp.eq.s32.totalorder %s19, 2
      %p130 = por %p128, %p129
      %p131 = scmp.ne.s32.totalorder %s123, %s126
      %p132 = scmp.eq.s32.totalorder %s19, 0
      %p133 = por %p131, %p132
      %p134 = scmp.ne.s32.totalorder %s123, %s126
      %p135 = scmp.eq.s32.totalorder %s24, 2
      %p136 = por %p134, %p135
      %p137 = scmp.ne.s32.totalorder %s126, %s127
      %p138 = scmp.eq.s32.totalorder %s24, 0
      %p139 = por %p137, %p138
      %p140 = scmp.ne.s32.totalorder %s126, %s127
      %p141 = scmp.eq.s32.totalorder %s25, 2
      %p142 = por %p140, %p141
      %p144 = scmp.ne.s32.totalorder %s127, %s143
      %p145 = scmp.eq.s32.totalorder %s25, 0
      %p146 = por %p144, %p145
      %s147 = ssub.s32 %s19, %s26
      %p148 = scmp.eq.s32.totalorder %s147, 0
      %s150 = sadd.s32 %s149, 1
      %s151 = scalar_select %p148, %s149, %s150
      %p154 = pneg %p148
      %p155 = scmp.eq.s32.totalorder %s19, 2
      %p156 = por %p154, %p155
      %p157 = scmp.ne.s32.totalorder %s149, %s152
      %p158 = scmp.eq.s32.totalorder %s19, 0
      %p159 = por %p157, %p158
      %p160 = scmp.ne.s32.totalorder %s149, %s152
      %p161 = scmp.eq.s32.totalorder %s24, 2
      %p162 = por %p160, %p161
      %p163 = scmp.ne.s32.totalorder %s152, %s153
      %p164 = scmp.eq.s32.totalorder %s24, 0
      %p165 = por %p163, %p164
      %p166 = scmp.ne.s32.totalorder %s152, %s153
      %p167 = scmp.eq.s32.totalorder %s25, 2
      %p168 = por %p166, %p167
      %p170 = scmp.ne.s32.totalorder %s153, %s169
      %p171 = scmp.eq.s32.totalorder %s25, 0
      %p172 = por %p170, %p171
      %p173 = scmp.le.s32.totalorder 1, %s19
      %p174 = scmp.lt.s32.totalorder %s19, 4
      %p175 = pnand %p173, %p174
      %p176 = pneg %p175
      // Predicated region
      $region9: #{tpu_custom_call.1} parent=5 // pred_check
        _
      $region10: #{tpu_custom_call.1} parent=5 // pred_check_branch
        %178 = sbr.rel (%p175) target = $region12
      $region11: #{tpu_custom_call.1} parent=5 // pred_region
        %s179 = ssub.s32 %s19, 1
        // Predicated region
        $region13: #{tpu_custom_call.1} parent=11 // pred_check
          %p180 = pneg %p66
        $region14: #{tpu_custom_call.1} parent=11 // pred_check_branch
          %182 = sbr.rel (%p180) target = $region16
        $region15: #{tpu_custom_call.1} parent=11 // pred_region
          %s184 = ssub.s32 512, 512
          %185 = vsyncadd [#allocation6], %s184
          %s186 = sshll.u32 [#allocation5], 4
          %s187 = int_to_ptr.vmem [resolvable:$true] %s186
          %192 = dma.hbm_to_vmem [thread:$0]  %s1, 512, %s187, [#allocation6], 128, 128, 8
        $region16: #{tpu_custom_call.1} parent=11 // pred_fallthru
          _
        // Predicated region
        $region17: #{tpu_custom_call.1} parent=11 // pred_check
          %p193 = pneg %p87
        $region18: #{tpu_custom_call.1} parent=11 // pred_check_branch
          %195 = sbr.rel (%p193) target = $region20
        $region19: #{tpu_custom_call.1} parent=11 // pred_region
          _
        $region20: #{tpu_custom_call.1} parent=11 // pred_fallthru
          _
      $region12: #{tpu_custom_call.1} parent=5 // pred_fallthru
        _
      %p196 = scmp.lt.s32.totalorder %s19, 3
      // Predicated region
      $region21: #{tpu_custom_call.1} parent=5 // pred_check
        %p197 = pneg %p196
      $region22: #{tpu_custom_call.1} parent=5 // pred_check_branch
        %199 = sbr.rel (%p197) target = $region24
      $region23: #{tpu_custom_call.1} parent=5 // pred_region
        // Predicated region
        $region25: #{tpu_custom_call.1} parent=23 // pred_check
          %p200 = pneg %p39
        $region26: #{tpu_custom_call.1} parent=23 // pred_check_branch
          %202 = sbr.rel (%p200) target = $region28
        $region27: #{tpu_custom_call.1} parent=23 // pred_region
          %s203 = sand.u32 %s29, 1
          %s204 = scalar_lea.sflag [#allocation3], %s203
          %s205 = sand.u32 %s29, 1
          %s206 = smul.addr %s205, 8
          %s207 = scalar_lea.vmem [#allocation2], %s206
          %s209 = ssub.s32 128, 128
          %210 = vsyncadd %s204, %s209
          %s211 = smul.addr %s19, 128
          %s212 = scalar_lea.hbm %s0, %s211
          %s214 = sshll.u32 %s207, 4
          %s215 = int_to_ptr.vmem [resolvable:$true] %s214
          %217 = dma.hbm_to_vmem [thread:$0]  %s212, 128, %s215, %s204
        $region28: #{tpu_custom_call.1} parent=23 // pred_fallthru
          _
      $region24: #{tpu_custom_call.1} parent=5 // pred_fallthru
        _
      %p218 = scmp.le.s32.totalorder 1, %s19
      %p219 = scmp.lt.s32.totalorder %s19, 4
      %p220 = pnand %p218, %p219
      %p221 = pneg %p220
      // Predicated region
      $region29: #{tpu_custom_call.1} parent=5 // pred_check
        _
      $region30: #{tpu_custom_call.1} parent=5 // pred_check_branch
        %223 = sbr.rel (%p220) target = $region32
      $region31: #{tpu_custom_call.1} parent=5 // pred_region
        %s224 = ssub.s32 %s19, 1
        %s225 = sand.u32 %s32, 1
        %s226 = scalar_lea.sflag [#allocation3], %s225
        %s227 = sand.u32 %s32, 1
        %s228 = smul.addr %s227, 8
        %s229 = scalar_lea.vmem [#allocation2], %s228
        // Predicated region
        $region33: #{tpu_custom_call.1} parent=31 // pred_check
          %p230 = pneg %p45
        $region34: #{tpu_custom_call.1} parent=31 // pred_check_branch
          %232 = sbr.rel (%p230) target = $region36
        $region35: #{tpu_custom_call.1} parent=31 // pred_region
          %233 = dma.done %s226, 128
        $region36: #{tpu_custom_call.1} parent=31 // pred_fallthru
          _
        // Predicated region
        $region37: #{tpu_custom_call.1} parent=31 // pred_check
          %p234 = pneg %p66
        $region38: #{tpu_custom_call.1} parent=31 // pred_check_branch
          %236 = sbr.rel (%p234) target = $region40
        $region39: #{tpu_custom_call.1} parent=31 // pred_region
          %237 = dma.done [#allocation6], 512
        $region40: #{tpu_custom_call.1} parent=31 // pred_fallthru
          _
        %s238 = sand.u32 %s32, 1
        %s239 = scalar_lea.sflag [#allocation3], %s238
        %s240 = sand.u32 %s32, 1
        %s241 = smul.addr %s240, 8
        %s242 = scalar_lea.vmem [#allocation2], %s241
        %p243 = pneg %p45
        %p244 = pneg %p42
        %p245 = pneg %p66
        %p246 = pneg %p63
        %p247 = pneg %p87
        %p248 = pneg %p84
        %p249 = pneg %p113
        %p250 = pneg %p110
        %p251 = scmp.lt.s32.totalorder %s24, 2
        %s252 = scalar_select %p251, %s24, 2
        %s253 = smul.addr %s252, 8
        %s254 = scalar_lea.vmem %s3, %s253
        %p255 = pneg %p139
        %p256 = pneg %p136
        %p257 = scmp.lt.s32.totalorder %s24, 2
        %s258 = scalar_select %p257, %s24, 2
        %s259 = smul.addr %s258, 8
        %s260 = scalar_lea.vmem %s4, %s259
        %p261 = pneg %p165
        %p262 = pneg %p162
        %s263 = sand.u32 %s152, 1
        %s264 = scalar_lea.sflag [#allocation4], %s263
        %s265 = sand.u32 %s152, 1
        %s266 = smul.addr %s265, 4
        %s267 = scalar_lea.vmem [#allocation7], %s266
        %p268 = scmp.lt.s32.totalorder %s24, 2
        %s269 = scalar_select %p268, %s24, 2
        %s270 = smul.addr %s269, 8
        %s271 = scalar_lea.vmem %s3, %s270
        %p272 = scmp.lt.s32.totalorder %s24, 2
        %s273 = scalar_select %p272, %s24, 2
        %s274 = smul.addr %s273, 8
        %s275 = scalar_lea.vmem %s4, %s274
        %v276 = vld [vmem:[%s229] sm:$0xff]
        %v277 = vld [vmem:[#allocation5] sm:$0xff]
        %v278 = vld [vmem:[#allocation5 + $0x8] sm:$0xff]
        %v279 = vld [vmem:[#allocation5 + $0x10] sm:$0xff]
        %v280 = vld [vmem:[#allocation5 + $0x18] sm:$0xff]
        %v281 = vld [vmem:[%s2] sm:$0x1]
        %v283 = vlaneseq
        %v284 = vshrl.u32 %v283, 7
        %v285 = vsub.s32 0, %v284
        %v286 = vrot.slane %v281, %v285
        %vm288 = vcmask 261120
        %v290 = vsel %vm288, %v276, 0
        %292 = vmatprep.subr.mxu0 0.0
        %293 = vmatpush1.msra.mxu0 %v277
        %294 = vmatprep.subr.mxu0 0.0
        %295 = vmatpush1.msra.mxu0 %v278
        %296 = vmatprep.subr.mxu0 0.0
        %297 = vmatpush1.msra.mxu0 %v279
        %298 = vmatprep.subr.mxu0 0.0
        %299 = vmatpush1.msra.mxu0 %v280
        %300 = vmatprep.subr.mxu0 0.0
        %301 = vmatpush1.msra.mxu0 0.0
        %302 = vmatprep.subr.mxu0 0.0
        %303 = vmatpush1.msra.mxu0 0.0
        %304 = vmatprep.subr.mxu0 0.0
        %305 = vmatpush1.msra.mxu0 0.0
        %306 = vmatprep.subr.mxu0 0.0
        %307 = vmatpush1.msra.mxu0 0.0
        %308 = vmatprep.subr.mxu0 0.0
        %309 = vmatpush1.msra.mxu0 0.0
        %310 = vmatprep.subr.mxu0 0.0
        %311 = vmatpush1.msra.mxu0 0.0
        %312 = vmatprep.subr.mxu0 0.0
        %313 = vmatpush1.msra.mxu0 0.0
        %314 = vmatprep.subr.mxu0 0.0
        %315 = vmatpush1.msra.mxu0 0.0
        %316 = vmatprep.subr.mxu0 0.0
        %317 = vmatpush1.msra.mxu0 0.0
        %318 = vmatprep.subr.mxu0 0.0
        %319 = vmatpush1.msra.mxu0 0.0
        %320 = vmatprep.subr.mxu0 0.0
        %321 = vmatpush1.msra.mxu0 0.0
        %322 = vmatprep.subr.mxu0 0.0
        %323 = vmatpush1.msra.mxu0 0.0
        %324 = vmatprep.subr.mxu0 0.0
        %325 = vmatpush1.msra.mxu0 0.0
        %326 = vmatprep.subr.mxu0 0.0
        %327 = vmatpush1.msra.mxu0 0.0
        %328 = vmatprep.subr.mxu0 0.0
        %329 = vmatpush1.msra.mxu0 0.0
        %330 = vmatprep.subr.mxu0 0.0
        %331 = vmatpush1.msra.mxu0 0.0
        %332 = vmatprep.subr.mxu0 0.0
        %333 = vmatpush1.msra.mxu0 0.0
        %334 = vmatprep.subr.mxu0 0.0
        %335 = vmatpush1.msra.mxu0 0.0
        %336 = vmatprep.subr.mxu0 0.0
        %337 = vmatpush1.msra.mxu0 0.0
        %338 = vmatprep.subr.mxu0 0.0
        %339 = vmatpush1.msra.mxu0 0.0
        %340 = vmatprep.subr.mxu0 0.0
        %341 = vmatpush1.msra.mxu0 0.0
        %342 = vmatprep.subr.mxu0 0.0
        %343 = vmatpush1.msra.mxu0 0.0
        %344 = vmatprep.subr.mxu0 0.0
        %345 = vmatpush1.msra.mxu0 0.0
        %346 = vmatprep.subr.mxu0 0.0
        %347 = vmatpush1.msra.mxu0 0.0
        %348 = vmatprep.subr.mxu0 0.0
        %349 = vmatpush1.msra.mxu0 0.0
        %350 = vmatprep.subr.mxu0 0.0
        %351 = vmatpush1.msra.mxu0 0.0
        %352 = vmatprep.subr.mxu0 0.0
        %353 = vmatpush1.msra.mxu0 0.0
        %354 = vmatprep.subr.mxu0 0.0
        %355 = vmatpush1.msra.mxu0 0.0
        %356 = vmatprep.mubr.f32.mxu0 0.0
        %357 = vmatmul.mubr.f32.gmra.mrb[0].mxu0 %v290
        %v358 = vpop.f32.mrb[0].mxu0
        %v359 = vadd.f32 %v286, %v358
        %v360 = vpop.f32.mrb[0].mxu0
        %361 = vdwg.mxu0
        %v362 = vlaneseq
        %v363 = vand.u32 %v362, 127
        %v364 = vlaneseq
        %v365 = vshrl.u32 %v364, 7
        %s366 = smul.u32 %s24, 8
        %v367 = vstv %s366
        %v368 = vadd.s32 %v365, %v367
        %vm369 = vcmp.lt.s32.totalorder %v368, 18
        %370 = vmax.xlane.f32.xlu0 %v359
        %v371 = vpop.xlane.xlu0 %370
        %v372 = vsub.f32 %v359, %v371
        %v373 = vmul.f32 %v372, 1.442695
        %v374 = vpow.pop %v373
        %vm375 = vcmp.lt.s32.totalorder %v363, 4
        %v376 = vsel %vm375, %v374, 0.0
        %377 = vadd.xlane.f32.xlu0 %v376
        %v378 = vpop.xlane.xlu0 %377
        %v379 = vrcp.pop %v378
        %v380 = vmul.f32 %v378, %v379
        %v381 = vsub.f32 2.0, %v380
        %v382 = vmul.f32 %v379, %v381
        %v383 = vmul.f32 %v376, %v382
        %384 = vmax.xlane.f32.xlu0 %v383
        %v385 = vpop.xlane.xlu0 %384
        %vm386 = vcmp.eq.f32.partialorder %v383, %v385
        %v387 = vsel %vm386, %v363, 128
        %v388 = vand.u32 %v387, 65535
        %v389 = vshra.s32 %v387, 16
        %v390 = vcvt.s32.f32 %v388
        %v391 = vcvt.s32.f32 %v389
        %392 = vmin.xlane.f32.xlu0 %v391
        %v393 = vpop.xlane.xlu0 %392
        %vm394 = vcmp.eq.f32.partialorder %v391, %v393
        %v395 = vsel %vm394, %v390, inf
        %396 = vmin.xlane.f32.xlu0 %v395
        %v397 = vpop.xlane.xlu0 %396
        %v398 = vcvt.f32.s32 %v397
        %v399 = vcvt.f32.s32 %v393
        %v400 = vshll.u32 %v399, 16
        %v401 = vadd.s32 %v400, %v398
        %vm402 = vcmp.eq.s32.totalorder %v363, %v401
        %v403 = vsel %vm402, -inf, %v383
        %404 = vmax.xlane.f32.xlu0 %v403
        %v405 = vpop.xlane.xlu0 %404
        %vm406 = vcmp.eq.f32.partialorder %v403, %v405
        %v407 = vsel %vm406, %v363, 128
        %v408 = vand.u32 %v407, 65535
        %v409 = vshra.s32 %v407, 16
        %v410 = vcvt.s32.f32 %v408
        %v411 = vcvt.s32.f32 %v409
        %412 = vmin.xlane.f32.xlu0 %v411
        %v413 = vpop.xlane.xlu0 %412
        %vm414 = vcmp.eq.f32.partialorder %v411, %v413
        %v415 = vsel %vm414, %v410, inf
        %416 = vmin.xlane.f32.xlu0 %v415
        %v417 = vpop.xlane.xlu0 %416
        %v418 = vcvt.f32.s32 %v417
        %v419 = vcvt.f32.s32 %v413
        %v420 = vshll.u32 %v419, 16
        %v421 = vadd.s32 %v420, %v418
        %v422 = vadd.f32 %v385, %v405
        %vm423 = vcmask 7168
        %v424 = vsel %vm423, %v385, %v405
        %v425 = vrcp.pop %v422
        %v426 = vmul.f32 %v422, %v425
        %v427 = vsub.f32 2.0, %v426
        %v428 = vmul.f32 %v425, %v427
        %v429 = vmul.f32 %v424, %v428
        %vm430 = vcmask 15360
        %431 = vst.msk [vmem:[%s275] sm:$0xff] %vm430, %v429
        %v432 = vsel %vm423, %v401, %v421
        %433 = vst.msk [vmem:[%s271] sm:$0xff] %vm430, %v432
        %v434 = vsel %vm369, 1, 0
        %vm435 = vcmp.eq.s32.totalorder %v434, 1
        %vm436 = vmand %vm402, %vm435
        %v437 = vsel %vm436, 1.0, 0.0
        %v438 = vsel %vm435, %v383, 0.0
        %v439 = vrot.slane %v437, 4
        %v440 = vadd.f32 %v437, %v439
        %v441 = vrot.slane %v440, 2
        %v442 = vadd.f32 %v440, %v441
        %v443 = vrot.slane %v442, 1
        %v444 = vadd.f32 %v442, %v443
        %v445 = vrot.slane %v438, 4
        %v446 = vadd.f32 %v438, %v445
        %v447 = vrot.slane %v446, 2
        %v448 = vadd.f32 %v446, %v447
        %v449 = vrot.slane %v448, 1
        %v450 = vadd.f32 %v448, %v449
        %v451 = vmul.f32 %v383, 1.442695
        %v452 = vpow.pop %v451
        %v453 = vsel %vm375, %v452, 0.0
        %454 = vadd.xlane.f32.xlu0 %v453
        %v455 = vpop.xlane.xlu0 %454
        %v456 = vlog2.pop %v455
        %v457 = vmul.f32 %v456, 0.6931472
        %v458 = vmul.f32 %v457, %v457
        %v459 = vsel %vm369, %v458, 0.0
        %v460 = vrot.slane %v459, 4
        %v461 = vadd.f32 %v459, %v460
        %v462 = vrot.slane %v461, 2
        %v463 = vadd.f32 %v461, %v462
        %v464 = vrot.slane %v463, 1
        %v465 = vadd.f32 %v463, %v464
        %vm466 = vcmask 1040384
        %v467 = vsel %vm466, %v444, %v450
        %vm468 = vcmask 1041408
        %v469 = vsel %vm468, %v467, %v465
        %470 = vst [vmem:[%s267] sm:$0x7] %v469
        %p471 = scmp.lt.s32.totalorder %s24, 2
        %s472 = scalar_select %p471, %s24, 2
        %s473 = smul.addr %s472, 8
        %s474 = scalar_lea.vmem %s3, %s473
        %p475 = scmp.lt.s32.totalorder %s24, 2
        %s476 = scalar_select %p475, %s24, 2
        %s477 = smul.addr %s476, 8
        %s478 = scalar_lea.vmem %s4, %s477
        %s479 = sand.u32 %s152, 1
        %s480 = scalar_lea.sflag [#allocation4], %s479
        %s481 = sand.u32 %s152, 1
        %s482 = smul.addr %s481, 4
        %s483 = scalar_lea.vmem [#allocation7], %s482
        // Predicated region
        $region41: #{tpu_custom_call.1} parent=31 // pred_check
          %p484 = pneg %p110
        $region42: #{tpu_custom_call.1} parent=31 // pred_check_branch
          %486 = sbr.rel (%p484) target = $region44
        $region43: #{tpu_custom_call.1} parent=31 // pred_region
          _
        $region44: #{tpu_custom_call.1} parent=31 // pred_fallthru
          _
        // Predicated region
        $region45: #{tpu_custom_call.1} parent=31 // pred_check
          %p487 = pneg %p136
        $region46: #{tpu_custom_call.1} parent=31 // pred_check_branch
          %489 = sbr.rel (%p487) target = $region48
        $region47: #{tpu_custom_call.1} parent=31 // pred_region
          _
        $region48: #{tpu_custom_call.1} parent=31 // pred_fallthru
          _
        // Predicated region
        $region49: #{tpu_custom_call.1} parent=31 // pred_check
          %p490 = pneg %p162
        $region50: #{tpu_custom_call.1} parent=31 // pred_check_branch
          %492 = sbr.rel (%p490) target = $region52
        $region51: #{tpu_custom_call.1} parent=31 // pred_region
          %s494 = ssub.s32 64, 64
          %495 = vsyncadd %s480, %s494
          %s496 = smul.addr %s24, 64
          %s497 = scalar_lea.hbm %s5, %s496
          %s499 = sshll.u32 %s483, 4
          %s500 = int_to_ptr.vmem [resolvable:$true] %s499
          %502 = dma.vmem_to_hbm [thread:$0]  %s500, 64, %s497, %s480
        $region52: #{tpu_custom_call.1} parent=31 // pred_fallthru
          _
      $region32: #{tpu_custom_call.1} parent=5 // pred_fallthru
        _
      %p503 = scmp.le.s32.totalorder 2, %s19
      // Predicated region
      $region53: #{tpu_custom_call.1} parent=5 // pred_check
        %p504 = pneg %p503
      $region54: #{tpu_custom_call.1} parent=5 // pred_check_branch
        %506 = sbr.rel (%p504) target = $region56
      $region55: #{tpu_custom_call.1} parent=5 // pred_region
        %s507 = ssub.s32 %s19, 2
        // Predicated region
        $region57: #{tpu_custom_call.1} parent=55 // pred_check
          %p508 = pneg %p116
        $region58: #{tpu_custom_call.1} parent=55 // pred_check_branch
          %510 = sbr.rel (%p508) target = $region60
        $region59: #{tpu_custom_call.1} parent=55 // pred_region
          %p511 = scmp.lt.s32.totalorder %s25, 2
          %s512 = scalar_select %p511, %s25, 2
          %s513 = smul.addr %s512, 8
          %s514 = scalar_lea.vmem %s3, %s513
        $region60: #{tpu_custom_call.1} parent=55 // pred_fallthru
          _
        // Predicated region
        $region61: #{tpu_custom_call.1} parent=55 // pred_check
          %p515 = pneg %p142
        $region62: #{tpu_custom_call.1} parent=55 // pred_check_branch
          %517 = sbr.rel (%p515) target = $region64
        $region63: #{tpu_custom_call.1} parent=55 // pred_region
          %p518 = scmp.lt.s32.totalorder %s25, 2
          %s519 = scalar_select %p518, %s25, 2
          %s520 = smul.addr %s519, 8
          %s521 = scalar_lea.vmem %s4, %s520
        $region64: #{tpu_custom_call.1} parent=55 // pred_fallthru
          _
        // Predicated region
        $region65: #{tpu_custom_call.1} parent=55 // pred_check
          %p522 = pneg %p168
        $region66: #{tpu_custom_call.1} parent=55 // pred_check_branch
          %524 = sbr.rel (%p522) target = $region68
        $region67: #{tpu_custom_call.1} parent=55 // pred_region
          %s525 = sand.u32 %s153, 1
          %s526 = scalar_lea.sflag [#allocation4], %s525
          %s527 = sand.u32 %s153, 1
          %s528 = smul.addr %s527, 4
          %s529 = scalar_lea.vmem [#allocation7], %s528
          %530 = dma.done %s526, 64
        $region68: #{tpu_custom_call.1} parent=55 // pred_fallthru
          _
      $region56: #{tpu_custom_call.1} parent=5 // pred_fallthru
        _
    $region6: #{tpu_custom_call.1} parent=1 // loop_footer
      %s23 = sadd.s32 1, %s19
    $region7: #{tpu_custom_call.1} parent=1 // loop_footer_branch
      %18 = sbr.rel target = $region3
    $region8: #{tpu_custom_call.1} parent=1 // loop_exit
      _
    %531 = vsyncpa [#allocation3], 1
    %s532 = scalar_lea.sflag [#allocation3], 1
    %533 = vsyncpa %s532, 1
    %534 = vsyncpa [#allocation6], 1
    %535 = vsyncpa [#allocation4], 1
    %s536 = scalar_lea.sflag [#allocation4], 1
    %537 = vsyncpa %s536, 1

</llo_original>
